<compile_context>
chip_gen: v5e
topology: v5e:2x2
jax: 0.10.0
libtpu: 0.0.40
codegen_flags: <defaults>
</compile_context>

<pallas_src>
import numpy as np
import jax
import jax.numpy as jnp
from jax import lax
from jax.experimental import pallas as pl
from jax.experimental.pallas import tpu as pltpu


def _round_up(x, m):
    return (x + m - 1) // m * m


def _derive_static(layer_cfg, D0, H0, W0):
    """Static python-int geometry shared by weight prep, wrapper and kernel."""
    L = len(layer_cfg)
    d_sizes = [D0]
    h, w = H0, W0
    for (_ci, _co, ker, pad) in layer_cfg:
        d_sizes.append((d_sizes[-1] + 2 * pad - ker) // 2 + 1)   # depth: conv stride 2
        h = (h - 1) // 2 + 1                                     # H/W: kernel 1, pad 0, stride 2
        w = (w - 1) // 2 + 1
    Hf, Wf, s = h, w, 2 ** L
    aug_rows, aug_cols = [], []
    for li, (c_in, c_out, _k, _p) in enumerate(layer_cfg):
        c_in_eff = 1 if li == 0 else c_in          # layer-0 channel repeat folded into weights
        aug_rows.append(c_out * d_sizes[li + 1] + (1 if li < L - 1 else 0))
        aug_cols.append(c_in_eff * d_sizes[li] + 1)
    HW, NHW = H0 * W0, Hf * Wf
    RPAD = _round_up(max(aug_rows), 8)             # 8-aligned row offsets for the layer blocks
    CPAD = max(max(aug_cols), NHW)
    return dict(L=L, d_sizes=tuple(d_sizes), Hf=Hf, Wf=Wf, s=s,
                aug_rows=tuple(aug_rows), aug_cols=tuple(aug_cols),
                r_last=layer_cfg[-1][1] * d_sizes[-1],
                HW=HW, NHW=NHW, RPAD=RPAD, CPAD=CPAD,
                packed_shape=(HW + L * RPAD, CPAD))


def _dense_depth_conv_matrix_np(w_koc, d_in, d_out, pad, stride=2):
    """(K, C_out, C_in) taps -> dense (C_out*d_out, C_in*d_in) banded depth-conv matrix.

    M[co*d_out + do, ci*d_in + di] = w[t, co, ci]  with di = stride*do + t - pad
    (zero otherwise; out-of-range taps == the conv's zero padding over D)."""
    k, c_out, c_in = w_koc.shape
    m = np.zeros((c_out * d_out, c_in * d_in), np.float32)
    for t in range(k):
        for do in range(d_out):
            di = stride * do + t - pad
            if 0 <= di < d_in:
                m[do::d_out, di::d_in] += w_koc[t]        # (c_out, c_in) block of taps
    return m


def prepare_packed_params(params, base_channels, layer_cfg, x_shape):
    """Host-side (numpy), ONE-TIME per parameter set.

    Builds a single packed f32 array containing
      rows [0, H*W)                : 0/1 H/W-subsample selector G  (H*W, Hf*Wf)
      rows [H*W + i*RPAD, ...)     : layer-i matrix [M_i | b_i] (+ ones-propagation row)
    so the kernel has exactly one parameter input (one DMA)."""
    _B, D0, H0, W0 = x_shape
    assert layer_cfg[0][0] == base_channels       # channel-repeat fold relies on this
    st = _derive_static(layer_cfg, D0, H0, W0)
    packed = np.zeros(st["packed_shape"], np.float32)

    # (a) composed stride-2 / kernel-1 / pad-0 H/W layers only ever read original
    #     positions (2**L)*h, (2**L)*w -> one 0/1 column per surviving (h, w).
    for hh in range(st["Hf"]):
        for ww in range(st["Wf"]):
            h0, w0 = st["s"] * hh, st["s"] * ww
            assert h0 < H0 and w0 < W0
            packed[h0 * W0 + w0, hh * st["Wf"] + ww] = 1.0

    # (b) per-layer banded depth-conv matrix with its bias as an extra column; all but
    #     the last layer also get a [0..0 1] row so the ones row survives every ReLU.
    for li, ((w_koc, bias), (_ci, _co, _k, pad)) in enumerate(zip(params, layer_cfg)):
        w_np = np.asarray(jax.device_get(w_koc), np.float32)
        b_np = np.asarray(jax.device_get(bias), np.float32)
        if li == 0:
            # Input channels are base_channels identical copies of x -> fold into weights.
            w_np = w_np.sum(axis=2, keepdims=True)
        d_in, d_out = st["d_sizes"][li], st["d_sizes"][li + 1]
        m = _dense_depth_conv_matrix_np(w_np, d_in, d_out, pad)
        blk = np.concatenate([m, np.repeat(b_np, d_out)[:, None]], axis=1)
        if li < st["L"] - 1:
            prop = np.zeros((1, blk.shape[1]), np.float32)
            prop[0, -1] = 1.0                     # ReLU(1) == 1, ones row propagates
            blk = np.concatenate([blk, prop], axis=0)
        assert blk.shape == (st["aug_rows"][li], st["aug_cols"][li])
        r0 = st["HW"] + li * st["RPAD"]
        packed[r0:r0 + blk.shape[0], :blk.shape[1]] = blk

    return jnp.asarray(packed), st


def make_encoder_forward(layer_cfg, x_shape):
    """Returns a jitted forward(x, packed) -> (B, latent, D_out, H_out, W_out)."""
    B, D0, H0, W0 = x_shape
    st = _derive_static(layer_cfg, D0, H0, W0)
    L, Hf, Wf = st["L"], st["Hf"], st["Wf"]
    HW, NHW, RPAD = st["HW"], st["NHW"], st["RPAD"]
    aug_rows, aug_cols, r_last = st["aug_rows"], st["aug_cols"], st["r_last"]
    c_last, d_last = layer_cfg[-1][1], st["d_sizes"][-1]
    n_lanes = B * NHW

    def kernel(x_ref, p_ref, o_ref):
        # x_ref: (B, D0, H0*W0)  raw input slab (one VMEM block, one DMA)
        # p_ref: packed {H/W selector, layer matrices+biases}  (one VMEM block, one DMA)
        # o_ref: (B, c_last*d_last, Hf*Wf)  batch-major -> wrapper only reshapes
        g = p_ref[0:HW, 0:NHW]                                   # (HW, NHW) 0/1 selector
        # In-kernel H/W gather + layout: lanes become (b, h_out, w_out) and stay there.
        a = jnp.concatenate(
            [jnp.dot(x_ref[b], g, preferred_element_type=jnp.float32) for b in range(B)],
            axis=1)                                              # (D0, B*NHW)
        a = jnp.concatenate([a, jnp.ones((1, n_lanes), jnp.float32)], axis=0)  # bias row
        for i in range(L):                                       # static unroll, 3 layers
            r0 = HW + i * RPAD
            w = p_ref[r0:r0 + aug_rows[i], 0:aug_cols[i]]
            # Conv3d(kernel=(K,1,1), pad=(p,0,0), stride=2) over depth + channel mixing
            # + bias == one matmul against a banded matrix; ReLU on the VPU.
            a = jnp.maximum(jnp.dot(w, a, preferred_element_type=jnp.float32), 0.0)
        for b in range(B):                                       # rows=(c,d), lanes=(h,w)
            o_ref[b] = a[:, b * NHW:(b + 1) * NHW].astype(o_ref.dtype)

    flops = (2 * B * D0 * HW * NHW
             + sum(2 * r * c * n_lanes for r, c in zip(aug_rows, aug_cols)))
    bytes_accessed = 4 * (B * D0 * HW
                          + st["packed_shape"][0] * st["packed_shape"][1]
                          + B * r_last * NHW)

    pallas_fn = pl.pallas_call(
        kernel,
        out_shape=jax.ShapeDtypeStruct((B, r_last, NHW), jnp.float32),
        in_specs=[pl.BlockSpec(memory_space=pltpu.MemorySpace.VMEM),
                  pl.BlockSpec(memory_space=pltpu.MemorySpace.VMEM)],
        out_specs=pl.BlockSpec(memory_space=pltpu.MemorySpace.VMEM),
        cost_estimate=pl.CostEstimate(flops=flops, transcendentals=0,
                                      bytes_accessed=bytes_accessed),
    )

    @jax.jit
    def forward(x, packed):
        out = pallas_fn(x.reshape(B, D0, HW), packed)   # free view of contiguous x
        # rows already (c, d) major/minor with batch leading -> pure (free) reshape.
        return out.reshape(B, c_last, d_last, Hf, Wf)

    return forward


def reference_forward(x, params, base_channels, layer_cfg):
    """Pure-JAX reference using lax.conv_general_dilated (PyTorch Conv3d semantics)."""
    xr = jnp.repeat(x[:, None], base_channels, axis=1)
    for (w_koc, b), (_c_in, _c_out, _ker, pad) in zip(params, layer_cfg):
        w = jnp.transpose(w_koc, (1, 2, 0))[:, :, :, None, None]   # (O, I, K, 1, 1)
        y = lax.conv_general_dilated(
            xr, w, window_strides=(2, 2, 2),
            padding=((pad, pad), (0, 0), (0, 0)),
            dimension_numbers=("NCDHW", "OIDHW", "NCDHW"))
        xr = jnp.maximum(y + b[None, :, None, None, None], 0.0)
    return xr


if __name__ == "__main__":
    base_channels = 4
    latent_dim = 8
    num_layers = 3
    spatial_dim = [16, 16, 16]

    # Replicate __init__ logic: ker=3, pad=1; ker becomes 5 when i >= num_layers-2;
    # channel_factor == 1 so C_hid never grows; final (non-linear) layer reuses ker=5.
    layer_cfg = []
    c_hid, ker, pad = base_channels, 3, 1
    for i in range(num_layers - 1):
        if i >= num_layers - 2:
            ker = 5
        layer_cfg.append((c_hid, c_hid, ker, pad))
    layer_cfg.append((c_hid, latent_dim, ker, pad))     # final Conv3d -> latent_dim
    layer_cfg = tuple(layer_cfg)

    # Deterministic parameter init (PyTorch Conv default: U(-1/sqrt(fan_in), +1/sqrt(fan_in))).
    key = jax.random.PRNGKey(0)
    params = []
    for (c_in, c_out, k, _p) in layer_cfg:
        key, kw, kb = jax.random.split(key, 3)
        bound = 1.0 / (c_in * k) ** 0.5
        w = jax.random.uniform(kw, (k, c_out, c_in), jnp.float32, -bound, bound)
        b = jax.random.uniform(kb, (c_out,), jnp.float32, -bound, bound)
        params.append((w, b))

    key, kx = jax.random.split(key)
    B = 2
    x = jax.random.normal(kx, (B, *spatial_dim), jnp.float32)   # (B, D, H, W)

    # One-time host-side weight prep (hoisted out of the per-call path), then the
    # per-call path is: two free reshapes + one fused pallas_call with 2 inputs.
    packed, _st = prepare_packed_params(params, base_channels, layer_cfg, x.shape)
    forward = make_encoder_forward(layer_cfg, x.shape)

    out = jax.block_until_ready(forward(x, packed))

    ref = reference_forward(x, params, base_channels, layer_cfg)
    assert out.shape == (B, latent_dim, 1, 2, 2), out.shape
    err = float(jnp.max(jnp.abs(out - ref)))
    assert jnp.allclose(out, ref, atol=2e-4, rtol=2e-4), err
    print("KERNEL_OK")
</pallas_src>

<mosaic_0001>
module attributes {stable_mosaic.version = 11 : i64} {
  func.func @kernel(%arg0: memref<2x16x256xf32, #tpu.memory_space<vmem>>, %arg1: memref<376x33xf32, #tpu.memory_space<vmem>>, %arg2: memref<2x8x4xf32, #tpu.memory_space<vmem>>) attributes {dimension_semantics = [], scalar_prefetch = 0 : i64, scratch_operands = 0 : i64, tpu.core_type = #tpu.core_type<tc>} {
    %c0 = arith.constant 0 : index
    %c0_0 = arith.constant 0 : index
    %0 = vector.load %arg1[%c0, %c0_0] : memref<376x33xf32, #tpu.memory_space<vmem>>, vector<256x4xf32>
    %c0_1 = arith.constant 0 : index
    %c0_2 = arith.constant 0 : index
    %c0_3 = arith.constant 0 : index
    %1 = vector.load %arg0[%c0_1, %c0_2, %c0_3] : memref<2x16x256xf32, #tpu.memory_space<vmem>>, vector<1x16x256xf32>
    %2 = vector.shape_cast %1 : vector<1x16x256xf32> to vector<16x256xf32>
    %cst = arith.constant dense<0.000000e+00> : vector<16x4xf32>
    %3 = tpu.matmul %2, %0, %cst {dimension_numbers = #tpu.dot_dimension_numbers<[1], [0], [0], [1], [0, 0, 1, 1], [], []>} : vector<16x256xf32>, vector<256x4xf32>, vector<16x4xf32> -> vector<16x4xf32>
    %c1 = arith.constant 1 : index
    %c0_4 = arith.constant 0 : index
    %c0_5 = arith.constant 0 : index
    %4 = vector.load %arg0[%c1, %c0_4, %c0_5] : memref<2x16x256xf32, #tpu.memory_space<vmem>>, vector<1x16x256xf32>
    %5 = vector.shape_cast %4 : vector<1x16x256xf32> to vector<16x256xf32>
    %cst_6 = arith.constant dense<0.000000e+00> : vector<16x4xf32>
    %6 = tpu.matmul %5, %0, %cst_6 {dimension_numbers = #tpu.dot_dimension_numbers<[1], [0], [0], [1], [0, 0, 1, 1], [], []>} : vector<16x256xf32>, vector<256x4xf32>, vector<16x4xf32> -> vector<16x4xf32>
    %7 = tpu.concatenate %3, %6 in 1 : vector<16x4xf32>, vector<16x4xf32> -> vector<16x8xf32>
    %cst_7 = arith.constant 1.000000e+00 : f32
    %8 = vector.broadcast %cst_7 : f32 to vector<1x8xf32>
    %9 = tpu.concatenate %7, %8 in 0 : vector<16x8xf32>, vector<1x8xf32> -> vector<17x8xf32>
    %c256 = arith.constant 256 : index
    %c0_8 = arith.constant 0 : index
    %10 = vector.load %arg1[%c256, %c0_8] : memref<376x33xf32, #tpu.memory_space<vmem>>, vector<33x17xf32>
    %cst_9 = arith.constant dense<0.000000e+00> : vector<33x8xf32>
    %11 = tpu.matmul %10, %9, %cst_9 {dimension_numbers = #tpu.dot_dimension_numbers<[1], [0], [0], [1], [0, 0, 1, 1], [], []>} : vector<33x17xf32>, vector<17x8xf32>, vector<33x8xf32> -> vector<33x8xf32>
    %cst_10 = arith.constant 0.000000e+00 : f32
    %12 = vector.broadcast %cst_10 : f32 to vector<33x8xf32>
    %13 = arith.maximumf %11, %12 : vector<33x8xf32>
    %c296 = arith.constant 296 : index
    %c0_11 = arith.constant 0 : index
    %14 = vector.load %arg1[%c296, %c0_11] : memref<376x33xf32, #tpu.memory_space<vmem>>, vector<13x33xf32>
    %cst_12 = arith.constant dense<0.000000e+00> : vector<13x8xf32>
    %15 = tpu.matmul %14, %13, %cst_12 {dimension_numbers = #tpu.dot_dimension_numbers<[1], [0], [0], [1], [0, 0, 1, 1], [], []>} : vector<13x33xf32>, vector<33x8xf32>, vector<13x8xf32> -> vector<13x8xf32>
    %cst_13 = arith.constant 0.000000e+00 : f32
    %16 = vector.broadcast %cst_13 : f32 to vector<13x8xf32>
    %17 = arith.maximumf %15, %16 : vector<13x8xf32>
    %c336 = arith.constant 336 : index
    %c0_14 = arith.constant 0 : index
    %18 = vector.load %arg1[%c336, %c0_14] : memref<376x33xf32, #tpu.memory_space<vmem>>, vector<8x13xf32>
    %cst_15 = arith.constant dense<0.000000e+00> : vector<8x8xf32>
    %19 = tpu.matmul %18, %17, %cst_15 {dimension_numbers = #tpu.dot_dimension_numbers<[1], [0], [0], [1], [0, 0, 1, 1], [], []>} : vector<8x13xf32>, vector<13x8xf32>, vector<8x8xf32> -> vector<8x8xf32>
    %cst_16 = arith.constant 0.000000e+00 : f32
    %20 = vector.broadcast %cst_16 : f32 to vector<8x8xf32>
    %21 = arith.maximumf %19, %20 : vector<8x8xf32>
    %22 = vector.extract_strided_slice %21 {offsets = [0, 0], sizes = [8, 4], strides = [1, 1]} : vector<8x8xf32> to vector<8x4xf32>
    %c0_17 = arith.constant 0 : index
    %c0_18 = arith.constant 0 : index
    %c0_19 = arith.constant 0 : index
    %23 = vector.load %arg2[%c0_17, %c0_18, %c0_19] : memref<2x8x4xf32, #tpu.memory_space<vmem>>, vector<1x8x4xf32>
    %24 = vector.shape_cast %23 : vector<1x8x4xf32> to vector<8x4xf32>
    %25 = vector.shape_cast %22 : vector<8x4xf32> to vector<1x8x4xf32>
    tpu.vector_store %arg2[%c0_17, %c0_18, %c0_19], %25 {strides = array<i32>} : memref<2x8x4xf32, #tpu.memory_space<vmem>>, vector<1x8x4xf32>,
    %26 = vector.extract_strided_slice %21 {offsets = [0, 4], sizes = [8, 4], strides = [1, 1]} : vector<8x8xf32> to vector<8x4xf32>
    %c1_20 = arith.constant 1 : index
    %c0_21 = arith.constant 0 : index
    %c0_22 = arith.constant 0 : index
    %27 = vector.load %arg2[%c1_20, %c0_21, %c0_22] : memref<2x8x4xf32, #tpu.memory_space<vmem>>, vector<1x8x4xf32>
    %28 = vector.shape_cast %27 : vector<1x8x4xf32> to vector<8x4xf32>
    %29 = vector.shape_cast %26 : vector<8x4xf32> to vector<1x8x4xf32>
    tpu.vector_store %arg2[%c1_20, %c0_21, %c0_22], %29 {strides = array<i32>} : memref<2x8x4xf32, #tpu.memory_space<vmem>>, vector<1x8x4xf32>,
    return
  }
}

</mosaic_0001>

<llo_original>
// kernel: forward.1
$region0: #{forward.1}
  #allocation0 [shape = 'u32[]', space=smem, size = 0x4, offset = 0x4, fixed_abs, tag = 'smem constant byte address 0x4 - core index']
  #allocation1 [shape = 'u32[72,128]{1,0:T(1,128)}', space=vmem, size = 0x9000, scoped, tag = 'internal scratch']
  %s0 = inlined_call_operand.vmem [shape: f32[2,16,256], index: 0, kind: input, shape index: {}]
  %s1 = inlined_call_operand.vmem [shape: f32[376,33], index: 1, kind: input, shape index: {}]
  %s2 = inlined_call_operand.vmem [shape: f32[2,8,4], index: 2, kind: output, shape index: {}]
  %s3 = sld [smem:[#allocation0]]
  $region18: #{forward.1} parent=0
    _
  %s5 = ssub.s32 1, %s3
  %s6 = scalar_select 0, %s5, %s3
  // Predicated region
  $region2: #{forward.1} parent=0 // pred_check
    _
  $region3: #{forward.1} parent=0 // pred_check_branch
    %8 = sbr.rel (0) target = $region5
  $region4: #{forward.1} parent=0 // pred_region
    _
  $region5: #{forward.1} parent=0 // pred_fallthru
    _
  // Predicated region
  $region6: #{forward.1} parent=0 // pred_check
    _
  $region7: #{forward.1} parent=0 // pred_check_branch
    %10 = sbr.rel (0) target = $region9
  $region8: #{forward.1} parent=0 // pred_region
    _
  $region9: #{forward.1} parent=0 // pred_fallthru
    _
  %v11 = vld [vmem:[%s1] sm:$0xff]
  %v12 = vld [vmem:[%s1 + $0x8] sm:$0xff]
  %v13 = vld [vmem:[%s1 + $0x10] sm:$0xff]
  %v14 = vld [vmem:[%s1 + $0x18] sm:$0xff]
  %v15 = vld [vmem:[%s1 + $0x20] sm:$0xff]
  %v16 = vld [vmem:[%s1 + $0x28] sm:$0xff]
  %v17 = vld [vmem:[%s1 + $0x30] sm:$0xff]
  %v18 = vld [vmem:[%s1 + $0x38] sm:$0xff]
  %v19 = vld [vmem:[%s1 + $0x40] sm:$0xff]
  %v20 = vld [vmem:[%s1 + $0x48] sm:$0xff]
  %v21 = vld [vmem:[%s1 + $0x50] sm:$0xff]
  %v22 = vld [vmem:[%s1 + $0x58] sm:$0xff]
  %v23 = vld [vmem:[%s1 + $0x60] sm:$0xff]
  %v24 = vld [vmem:[%s1 + $0x68] sm:$0xff]
  %v25 = vld [vmem:[%s1 + $0x70] sm:$0xff]
  %v26 = vld [vmem:[%s1 + $0x78] sm:$0xff]
  %v27 = vld [vmem:[%s1 + $0x80] sm:$0xff]
  %v28 = vld [vmem:[%s1 + $0x88] sm:$0xff]
  %v29 = vld [vmem:[%s1 + $0x90] sm:$0xff]
  %v30 = vld [vmem:[%s1 + $0x98] sm:$0xff]
  %v31 = vld [vmem:[%s1 + $0xa0] sm:$0xff]
  %v32 = vld [vmem:[%s1 + $0xa8] sm:$0xff]
  %v33 = vld [vmem:[%s1 + $0xb0] sm:$0xff]
  %v34 = vld [vmem:[%s1 + $0xb8] sm:$0xff]
  %v35 = vld [vmem:[%s1 + $0xc0] sm:$0xff]
  %v36 = vld [vmem:[%s1 + $0xc8] sm:$0xff]
  %v37 = vld [vmem:[%s1 + $0xd0] sm:$0xff]
  %v38 = vld [vmem:[%s1 + $0xd8] sm:$0xff]
  %v39 = vld [vmem:[%s1 + $0xe0] sm:$0xff]
  %v40 = vld [vmem:[%s1 + $0xe8] sm:$0xff]
  %v41 = vld [vmem:[%s1 + $0xf0] sm:$0xff]
  %v42 = vld [vmem:[%s1 + $0xf8] sm:$0xff]
  %v43 = vld [vmem:[%s0] sm:$0xff]
  %v44 = vld [vmem:[%s0 + $0x8] sm:$0xff]
  %v45 = vld [vmem:[%s0 + $0x10] sm:$0xff]
  %v46 = vld [vmem:[%s0 + $0x18] sm:$0xff]
  %47 = vmatpush.msra.mxu0 %v26
  %48 = vmatpush.msra.mxu0 %v25
  %49 = vmatpush.msra.mxu0 %v24
  %50 = vmatpush.msra.mxu0 %v23
  %51 = vmatpush.msra.mxu0 %v22
  %52 = vmatpush.msra.mxu0 %v21
  %53 = vmatpush.msra.mxu0 %v20
  %54 = vmatpush.msra.mxu0 %v19
  %55 = vmatpush.msra.mxu0 %v18
  %56 = vmatpush.msra.mxu0 %v17
  %57 = vmatpush.msra.mxu0 %v16
  %58 = vmatpush.msra.mxu0 %v15
  %59 = vmatpush.msra.mxu0 %v14
  %60 = vmatpush.msra.mxu0 %v13
  %61 = vmatpush.msra.mxu0 %v12
  %62 = vmatpush.msra.mxu0 %v11
  %63 = vmatmul.f32.gmra.mxu0 %v43
  %v64 = vpop.f32.mrf.mxu0
  %v65 = vadd.f32 0.0, %v64
  %66 = vmatmul.f32.gmra.mxu0 %v45
  %v67 = vpop.f32.mrf.mxu0
  %v68 = vadd.f32 0.0, %v67
  %69 = vdwg.mxu0
  %70 = vmatpush.msra.mxu0 %v42
  %71 = vmatpush.msra.mxu0 %v41
  %72 = vmatpush.msra.mxu0 %v40
  %73 = vmatpush.msra.mxu0 %v39
  %74 = vmatpush.msra.mxu0 %v38
  %75 = vmatpush.msra.mxu0 %v37
  %76 = vmatpush.msra.mxu0 %v36
  %77 = vmatpush.msra.mxu0 %v35
  %78 = vmatpush.msra.mxu0 %v34
  %79 = vmatpush.msra.mxu0 %v33
  %80 = vmatpush.msra.mxu0 %v32
  %81 = vmatpush.msra.mxu0 %v31
  %82 = vmatpush.msra.mxu0 %v30
  %83 = vmatpush.msra.mxu0 %v29
  %84 = vmatpush.msra.mxu0 %v28
  %85 = vmatpush.msra.mxu0 %v27
  %86 = vmatmul.f32.gmra.mxu0 %v44
  %v87 = vpop.f32.mrf.mxu0
  %v88 = vadd.f32 %v65, %v87
  %89 = vmatmul.f32.gmra.mxu0 %v46
  %v90 = vpop.f32.mrf.mxu0
  %v91 = vadd.f32 %v68, %v90
  %92 = vdwg.mxu0
  %s93 = scalar_lea.vmem %s0, 32
  %v94 = vld [vmem:[%s93] sm:$0xff]
  %v95 = vld [vmem:[%s93 + $0x8] sm:$0xff]
  %v96 = vld [vmem:[%s93 + $0x10] sm:$0xff]
  %v97 = vld [vmem:[%s93 + $0x18] sm:$0xff]
  %98 = vmatpush.msra.mxu0 %v26
  %99 = vmatpush.msra.mxu0 %v25
  %100 = vmatpush.msra.mxu0 %v24
  %101 = vmatpush.msra.mxu0 %v23
  %102 = vmatpush.msra.mxu0 %v22
  %103 = vmatpush.msra.mxu0 %v21
  %104 = vmatpush.msra.mxu0 %v20
  %105 = vmatpush.msra.mxu0 %v19
  %106 = vmatpush.msra.mxu0 %v18
  %107 = vmatpush.msra.mxu0 %v17
  %108 = vmatpush.msra.mxu0 %v16
  %109 = vmatpush.msra.mxu0 %v15
  %110 = vmatpush.msra.mxu0 %v14
  %111 = vmatpush.msra.mxu0 %v13
  %112 = vmatpush.msra.mxu0 %v12
  %113 = vmatpush.msra.mxu0 %v11
  %114 = vmatmul.f32.gmra.mxu0 %v94
  %v115 = vpop.f32.mrf.mxu0
  %v116 = vadd.f32 0.0, %v115
  %117 = vmatmul.f32.gmra.mxu0 %v96
  %v118 = vpop.f32.mrf.mxu0
  %v119 = vadd.f32 0.0, %v118
  %120 = vdwg.mxu0
  %121 = vmatpush.msra.mxu0 %v42
  %122 = vmatpush.msra.mxu0 %v41
  %123 = vmatpush.msra.mxu0 %v40
  %124 = vmatpush.msra.mxu0 %v39
  %125 = vmatpush.msra.mxu0 %v38
  %126 = vmatpush.msra.mxu0 %v37
  %127 = vmatpush.msra.mxu0 %v36
  %128 = vmatpush.msra.mxu0 %v35
  %129 = vmatpush.msra.mxu0 %v34
  %130 = vmatpush.msra.mxu0 %v33
  %131 = vmatpush.msra.mxu0 %v32
  %132 = vmatpush.msra.mxu0 %v31
  %133 = vmatpush.msra.mxu0 %v30
  %134 = vmatpush.msra.mxu0 %v29
  %135 = vmatpush.msra.mxu0 %v28
  %136 = vmatpush.msra.mxu0 %v27
  %137 = vmatmul.f32.gmra.mxu0 %v95
  %v138 = vpop.f32.mrf.mxu0
  %v139 = vadd.f32 %v116, %v138
  %140 = vmatmul.f32.gmra.mxu0 %v97
  %v141 = vpop.f32.mrf.mxu0
  %v142 = vadd.f32 %v119, %v141
  %143 = vdwg.mxu0
  %146 = vrot.lane.b32.xlu0 %v139, 4
  %v147 = vpop.permute.xlu0 %146
  %148 = vrot.lane.b32.xlu0 %v142, 4
  %v149 = vpop.permute.xlu0 %148
  %vm152 = vcmask 31744
  %v153 = vsel %vm152, %v88, %v147
  %v154 = vsel %vm152, %v91, %v149
  %v155 = vld [vmem:[%s1 + $0x100] sm:$0xff]
  %v156 = vld [vmem:[%s1 + $0x108] sm:$0xff]
  %v157 = vld [vmem:[%s1 + $0x110] sm:$0xff]
  %v158 = vld [vmem:[%s1 + $0x118] sm:$0xff]
  %v159 = vld [vmem:[%s1 + $0x120] sm:$0x1]
  %vm160 = vcmask 138240
  %v162 = vsel %vm160, %v155, 0
  %v165 = vsel %vm160, %v156, 0
  %v168 = vsel %vm160, %v157, 0
  %v171 = vsel %vm160, %v158, 0
  %v174 = vsel %vm160, %v159, 0
  %vm176 = vcmask 1040384
  %v178 = vsel %vm176, 1.0, 0
  %180 = vmatpush.msra.mxu0 0.0
  %181 = vmatpush.msra.mxu0 0.0
  %182 = vmatpush.msra.mxu0 0.0
  %183 = vmatpush.msra.mxu0 0.0
  %184 = vmatpush.msra.mxu0 0.0
  %185 = vmatpush.msra.mxu0 0.0
  %186 = vmatpush.msra.mxu0 0.0
  %187 = vmatpush.msra.mxu0 0.0
  %188 = vmatpush.msra.mxu0 0.0
  %189 = vmatpush.msra.mxu0 0.0
  %190 = vmatpush.msra.mxu0 0.0
  %191 = vmatpush.msra.mxu0 0.0
  %192 = vmatpush.msra.mxu0 0.0
  %193 = vmatpush.msra.mxu0 %v178
  %194 = vmatpush.msra.mxu0 %v154
  %195 = vmatpush.msra.mxu0 %v153
  %196 = vmatmul.f32.gmra.mxu0 %v162
  %v197 = vpop.f32.mrf.mxu0
  %v198 = vadd.f32 0.0, %v197
  %199 = vmatmul.f32.gmra.mxu0 %v165
  %v200 = vpop.f32.mrf.mxu0
  %v201 = vadd.f32 0.0, %v200
  %202 = vmatmul.f32.gmra.mxu0 %v168
  %v203 = vpop.f32.mrf.mxu0
  %v204 = vadd.f32 0.0, %v203
  %205 = vmatmul.f32.gmra.mxu0 %v171
  %v206 = vpop.f32.mrf.mxu0
  %v207 = vadd.f32 0.0, %v206
  %208 = vmatmul.f32.gmra.mxu0 %v174
  %v209 = vpop.f32.mrf.mxu0
  %v210 = vadd.f32 0.0, %v209
  %211 = vdwg.mxu0
  %v212 = vmax.f32 %v198, 0.0
  %v213 = vmax.f32 %v201, 0.0
  %v214 = vmax.f32 %v204, 0.0
  %v215 = vmax.f32 %v207, 0.0
  %v216 = vmax.f32 %v210, 0.0
  %v217 = vld [vmem:[%s1 + $0x128] sm:$0xff]
  %v218 = vld [vmem:[%s1 + $0x130] sm:$0x1f]
  %vm219 = vcmask 269312
  %v221 = vsel %vm219, %v217, 0
  %v224 = vsel %vm219, %v218, 0
  %v227 = vsel %vm176, %v216, 0
  %229 = vmatpush.msra.mxu0 0.0
  %230 = vmatpush.msra.mxu0 0.0
  %231 = vmatpush.msra.mxu0 0.0
  %232 = vmatpush.msra.mxu0 0.0
  %233 = vmatpush.msra.mxu0 0.0
  %234 = vmatpush.msra.mxu0 0.0
  %235 = vmatpush.msra.mxu0 0.0
  %236 = vmatpush.msra.mxu0 0.0
  %237 = vmatpush.msra.mxu0 0.0
  %238 = vmatpush.msra.mxu0 0.0
  %239 = vmatpush.msra.mxu0 0.0
  %240 = vmatpush.msra.mxu0 %v227
  %241 = vmatpush.msra.mxu0 %v215
  %242 = vmatpush.msra.mxu0 %v214
  %243 = vmatpush.msra.mxu0 %v213
  %244 = vmatpush.msra.mxu0 %v212
  %245 = vmatmul.f32.gmra.mxu0 %v221
  %v246 = vpop.f32.mrf.mxu0
  %v247 = vadd.f32 0.0, %v246
  %248 = vmatmul.f32.gmra.mxu0 %v224
  %v249 = vpop.f32.mrf.mxu0
  %v250 = vadd.f32 0.0, %v249
  %251 = vdwg.mxu0
  %v252 = vmax.f32 %v247, 0.0
  %v253 = vmax.f32 %v250, 0.0
  %v254 = vld [vmem:[%s1 + $0x150] sm:$0xff]
  %vm255 = vcmask 105472
  %v257 = vsel %vm255, %v254, 0
  %vm259 = vcmask 1044480
  %v261 = vsel %vm259, %v253, 0
  %263 = vmatpush.msra.mxu0 0.0
  %264 = vmatpush.msra.mxu0 0.0
  %265 = vmatpush.msra.mxu0 0.0
  %266 = vmatpush.msra.mxu0 0.0
  %267 = vmatpush.msra.mxu0 0.0
  %268 = vmatpush.msra.mxu0 0.0
  %269 = vmatpush.msra.mxu0 0.0
  %270 = vmatpush.msra.mxu0 0.0
  %271 = vmatpush.msra.mxu0 0.0
  %272 = vmatpush.msra.mxu0 0.0
  %273 = vmatpush.msra.mxu0 0.0
  %274 = vmatpush.msra.mxu0 0.0
  %275 = vmatpush.msra.mxu0 0.0
  %276 = vmatpush.msra.mxu0 0.0
  %277 = vmatpush.msra.mxu0 %v261
  %278 = vmatpush.msra.mxu0 %v252
  %279 = vmatmul.f32.gmra.mxu0 %v257
  %v280 = vpop.f32.mrf.mxu0
  %v281 = vadd.f32 0.0, %v280
  %282 = vdwg.mxu0
  %v283 = vmax.f32 %v281, 0.0
  %284 = vst.msk [vmem:[%s2] sm:$0xff] %vm152, %v283
  %286 = vrot.lane.b32.xlu0 %v283, 124
  %v287 = vpop.permute.xlu0 %286
  %s289 = scalar_lea.vmem %s2, 8
  %290 = vst.msk [vmem:[%s289] sm:$0xff] %vm152, %v287
  // Predicated region
  $region10: #{forward.1} parent=0 // pred_check
    _
  $region11: #{forward.1} parent=0 // pred_check_branch
    %292 = sbr.rel (0) target = $region13
  $region12: #{forward.1} parent=0 // pred_region
    _
  $region13: #{forward.1} parent=0 // pred_fallthru
    _
  // Predicated region
  $region14: #{forward.1} parent=0 // pred_check
    _
  $region15: #{forward.1} parent=0 // pred_check_branch
    %294 = sbr.rel (0) target = $region17
  $region16: #{forward.1} parent=0 // pred_region
    _
  $region17: #{forward.1} parent=0 // pred_fallthru
    _

</llo_original>
